<compile_context>
chip_gen: v7x
topology: tpu7x:2x2x1
jax: 0.10.0
libtpu: 0.0.40
codegen_flags: <defaults>
</compile_context>

<pallas_src>
import functools

import jax
import jax.numpy as jnp
from jax import lax
from jax.experimental import pallas as pl
from jax.experimental.pallas import tpu as pltpu

# ---- deterministic "parameters" (from the module __init__) -----------------
BN_WEIGHT = 1.0   # torch.nn.init.constant(bn.weight, 1)
BN_BIAS = 0.0     # BatchNorm2d bias default init
BN_EPS = 1e-5
CE_W0 = 1.0       # nn.CrossEntropyLoss(weight=[1, 36]), reduction='mean' (weighted mean)
CE_W1 = 36.0
WEIGHT_BA_LOSS = 0.67
WEIGHT_CE_LOSS = 0.33

# accumulator slot indices in the (N, 1, 128) VMEM slabs
_S_NLL, _S_LNLL, _S_LBL, _S_D, _S_D2 = 0, 1, 2, 3, 4          # phase 0 sums
_S_T, _S_TL = 5, 6                                            # phase 1 sums (tanh terms)
_S_MEAN, _S_SCALE = 7, 8                                      # hoisted BN constants
_N_SLOTS = 9


def _loss_ce_iou_kernel(y0_ref, y1_ref, lbl_ref, out_ref, vacc_ref, *,
                        n_total, hw_valid, needs_mask):
    phase = pl.program_id(0)
    t = pl.program_id(1)
    nt = pl.num_programs(1)
    n, r, lanes = lbl_ref.shape                      # (N, r_tile, 128)

    # In-kernel class-plane subtraction and label cast (no wrapper-side HBM passes).
    y0 = y0_ref[...].astype(jnp.float32)             # (N, r, 128)
    y1 = y1_ref[...].astype(jnp.float32)
    diff = y1 - y0
    lblf = lbl_ref[...].astype(jnp.float32)

    if needs_mask:
        row = lax.broadcasted_iota(jnp.int32, (n, r, lanes), 1)
        lane = lax.broadcasted_iota(jnp.int32, (n, r, lanes), 2)
        pos = (t * r + row) * lanes + lane           # flattened spatial position
        valid = pos < hw_valid
        zf = jnp.zeros_like(diff)
        diff = jnp.where(valid, diff, zf)
        lblf = jnp.where(valid, lblf, zf)

    def rowsum(x):
        # (N, r, 128) -> (N, 1, 128): VPU adds across row tiles + one sublane reduce.
        return jnp.sum(x, axis=1, keepdims=True)

    @pl.when(jnp.logical_and(phase == 0, t == 0))
    def _init():
        vacc_ref[...] = jnp.zeros_like(vacc_ref)

    @pl.when(phase == 0)
    def _phase0():
        # 2-class cross entropy: nll = softplus((1 - 2*lbl) * (y1 - y0))
        x = (1.0 - 2.0 * lblf) * diff
        nll = jnp.maximum(x, 0.0) + jnp.log1p(jnp.exp(-jnp.abs(x)))
        if needs_mask:
            nll = jnp.where(valid, nll, jnp.zeros_like(nll))
        vacc_ref[_S_NLL] += rowsum(nll)
        vacc_ref[_S_LNLL] += rowsum(lblf * nll)
        vacc_ref[_S_LBL] += rowsum(lblf)
        vacc_ref[_S_D] += rowsum(diff)
        vacc_ref[_S_D2] += rowsum(diff * diff)

    @pl.when(jnp.logical_and(phase == 0, t == nt - 1))
    def _bn_stats():
        # Hoisted (once-per-problem) training-mode BatchNorm statistics.
        inv_n = 1.0 / n_total

        def total(i):
            v = jnp.sum(vacc_ref[i], axis=2, keepdims=True)      # (N, 1, 1)
            return jnp.sum(v, axis=0, keepdims=True)             # (1, 1, 1)

        mean = total(_S_D) * inv_n
        # Biased variance via E[x^2] - mean^2; clamp >= 0 against cancellation.
        var = jnp.maximum(total(_S_D2) * inv_n - mean * mean, 0.0)
        half_scale = lax.rsqrt(var + BN_EPS) * (0.5 * BN_WEIGHT)  # 0.5 of tanh-sigmoid folded in
        vacc_ref[_S_MEAN] = jnp.broadcast_to(mean, (n, 1, 128))
        vacc_ref[_S_SCALE] = jnp.broadcast_to(half_scale, (n, 1, 128))

    @pl.when(phase == 1)
    def _phase1():
        mean = vacc_ref[_S_MEAN]                      # (N, 1, 128), constant rows
        hs = vacc_ref[_S_SCALE]
        # sigmoid(dnorm) = 0.5 * tanh(dnorm / 2) + 0.5 ; accumulate only the tanh terms.
        tv = jnp.tanh((diff - mean) * hs + (0.5 * BN_BIAS))
        if needs_mask:
            tv = jnp.where(valid, tv, jnp.zeros_like(tv))
        vacc_ref[_S_T] += rowsum(tv)
        vacc_ref[_S_TL] += rowsum(tv * lblf)

    @pl.when(jnp.logical_and(phase == 1, t == nt - 1))
    def _finalize():
        def total(i):
            v = jnp.sum(vacc_ref[i], axis=2, keepdims=True)      # (N, 1, 1)
            return jnp.sum(v, axis=0, keepdims=True)             # (1, 1, 1)

        s_nll, s_lnll, s_l = total(_S_NLL), total(_S_LNLL), total(_S_LBL)
        s_t, s_tl = total(_S_T), total(_S_TL)

        # Weighted CE:  sum(w*nll)/sum(w),  w = CE_W0*(1-l) + CE_W1*l
        sum_w = CE_W0 * n_total + (CE_W1 - CE_W0) * s_l
        sum_wnll = CE_W0 * s_nll + (CE_W1 - CE_W0) * s_lnll
        ce_loss = sum_wnll / sum_w

        # IoU: sigmoid sums recovered from the tanh sums.
        sum_sig = 0.5 * s_t + 0.5 * n_total
        inter = 0.5 * s_tl + 0.5 * s_l
        union = sum_sig + s_l - inter
        iou_loss = 1.0 - inter / union

        loss = WEIGHT_BA_LOSS * iou_loss + WEIGHT_CE_LOSS * ce_loss   # (1, 1, 1)
        out_ref[...] = loss.reshape(1, 1).astype(out_ref.dtype)


def _pick_r_tile(rtot, n, target_step_bytes=8 << 20, vmem_input_budget=24 << 20):
    """Rows (of 128 lanes) per grid step: ~target HBM bytes/step, bounded by VMEM."""
    # HBM bytes per 128-lane row-group per step: n * 128 * (y0 f32 + y1 f32 + lbl i32).
    bytes_per_row = n * 128 * 12
    r = min(target_step_bytes // bytes_per_row,
            vmem_input_budget // (2 * bytes_per_row))   # x2: double-buffered inputs
    r = max(8, (r // 8) * 8)
    if r >= rtot:
        return rtot, 1
    n_tiles = -(-rtot // r)
    return r, n_tiles


def loss_ce_iou(y, lbl):
    """y: (N, 2, H, W) float logits; lbl: (N, 1, H, W) integer labels in {0, 1}."""
    N, C, H, W = y.shape
    assert C == 2, "LossCEIOU expects 2-class logits"
    hw = H * W
    hw_pad = ((hw + 127) // 128) * 128

    y3 = y.reshape(N, 2, hw)       # free reshapes of contiguous NCHW / NCHW-like arrays
    lbl2 = lbl.reshape(N, hw)
    if hw_pad != hw:
        # Rare fallback: one padding copy so H*W folds into (rows, 128); masked in-kernel.
        y3 = jnp.pad(y3, ((0, 0), (0, 0), (0, hw_pad - hw)))
        lbl2 = jnp.pad(lbl2, ((0, 0), (0, hw_pad - hw)))
    rtot = hw_pad // 128
    y4 = y3.reshape(N, 2, rtot, 128)
    lbl3 = lbl2.reshape(N, rtot, 128)

    r_tile, n_tiles = _pick_r_tile(rtot, N)
    needs_mask = (n_tiles * r_tile * 128) != hw

    kernel = functools.partial(
        _loss_ce_iou_kernel,
        n_total=float(N * hw),
        hw_valid=hw,
        needs_mask=needs_mask,
    )

    out = pl.pallas_call(
        kernel,
        out_shape=jax.ShapeDtypeStruct((1, 1), jnp.float32),
        grid_spec=pltpu.PrefetchScalarGridSpec(
            num_scalar_prefetch=0,
            grid=(2, n_tiles),  # (phase, spatial row-tile)
            in_specs=[
                # class-0 plane and class-1 plane of the same array (class dim squeezed)
                pl.BlockSpec((N, None, r_tile, 128), lambda p, t: (0, 0, t, 0)),
                pl.BlockSpec((N, None, r_tile, 128), lambda p, t: (0, 1, t, 0)),
                pl.BlockSpec((N, r_tile, 128), lambda p, t: (0, t, 0)),
            ],
            out_specs=pl.BlockSpec((1, 1), lambda p, t: (0, 0)),
            scratch_shapes=[pltpu.VMEM((_N_SLOTS, N, 1, 128), jnp.float32)],
        ),
        compiler_params=pltpu.CompilerParams(
            dimension_semantics=("arbitrary", "arbitrary"),
            vmem_limit_bytes=40 * 1024 * 1024,   # ~17 MiB used; safe on v5e/v6e/v7x
        ),
    )(y4, y4, lbl3)
    return out[0, 0]


def _loss_ce_iou_ref(y, lbl):
    """Pure-JAX reference (same math as the PyTorch module's forward, training-mode BN)."""
    z0 = y[:, 0].astype(jnp.float32).reshape(-1)
    z1 = y[:, 1].astype(jnp.float32).reshape(-1)
    l = lbl.astype(jnp.float32).reshape(-1)
    diff = z1 - z0
    nll = jax.nn.softplus((1.0 - 2.0 * l) * diff)
    w = CE_W0 * (1.0 - l) + CE_W1 * l
    ce = jnp.sum(w * nll) / jnp.sum(w)
    mean = jnp.mean(diff)
    var = jnp.mean((diff - mean) ** 2)
    s = jax.nn.sigmoid((diff - mean) * lax.rsqrt(var + BN_EPS) * BN_WEIGHT + BN_BIAS)
    inter = jnp.sum(s * l)
    union = jnp.sum(s) + jnp.sum(l) - inter
    return (1.0 - inter / union) * WEIGHT_BA_LOSS + ce * WEIGHT_CE_LOSS


if __name__ == "__main__":
    key = jax.random.PRNGKey(0)
    k_y, k_l = jax.random.split(key)
    N, H, W = 2, 16, 16
    y = jax.random.normal(k_y, (N, 2, H, W), dtype=jnp.float32)
    lbl = jax.random.randint(k_l, (N, 1, H, W), 0, 2, dtype=jnp.int32)

    loss = jax.jit(loss_ce_iou)(y, lbl)
    jax.block_until_ready(loss)

    ref = _loss_ce_iou_ref(y, lbl)
    assert abs(float(loss) - float(ref)) < 3e-4, (float(loss), float(ref))
    print("KERNEL_OK")
</pallas_src>

<mosaic_0001>
module attributes {stable_mosaic.version = 11 : i64} {
  func.func @_loss_ce_iou_kernel(%arg0: i32, %arg1: i32, %arg2: memref<2x1x2x128xf32, #tpu.memory_space<vmem>>, %arg3: memref<2x1x2x128xf32, #tpu.memory_space<vmem>>, %arg4: memref<2x2x128xi32, #tpu.memory_space<vmem>>, %arg5: memref<1x1xf32, #tpu.memory_space<vmem>>, %arg6: memref<9x2x1x128xf32, #tpu.memory_space<vmem>>) attributes {dimension_semantics = [#tpu.dimension_semantics<arbitrary>, #tpu.dimension_semantics<arbitrary>], iteration_bounds = array<i64: 2, 1>, scalar_prefetch = 0 : i64, scratch_operands = 1 : i64, tpu.core_type = #tpu.core_type<tc>, window_params = [{transform_indices = @transform_0, window_bounds = array<i64: 2, 1, 2, 128>}, {transform_indices = @transform_1, window_bounds = array<i64: 2, 1, 2, 128>}, {transform_indices = @transform_2, window_bounds = array<i64: 2, 2, 128>}, {pipeline_mode = #tpu.pipeline_mode<synchronous>, transform_indices = @transform_3, window_bounds = array<i64: 1, 1>}]} {
    %c0 = arith.constant 0 : index
    %c0_0 = arith.constant 0 : index
    %c0_1 = arith.constant 0 : index
    %c0_2 = arith.constant 0 : index
    %0 = vector.load %arg2[%c0, %c0_0, %c0_1, %c0_2] : memref<2x1x2x128xf32, #tpu.memory_space<vmem>>, vector<2x1x2x128xf32>
    %1 = vector.shape_cast %0 : vector<2x1x2x128xf32> to vector<2x2x128xf32>
    %c0_3 = arith.constant 0 : index
    %c0_4 = arith.constant 0 : index
    %c0_5 = arith.constant 0 : index
    %c0_6 = arith.constant 0 : index
    %2 = vector.load %arg3[%c0_3, %c0_4, %c0_5, %c0_6] : memref<2x1x2x128xf32, #tpu.memory_space<vmem>>, vector<2x1x2x128xf32>
    %3 = vector.shape_cast %2 : vector<2x1x2x128xf32> to vector<2x2x128xf32>
    %4 = arith.subf %3, %1 : vector<2x2x128xf32>
    %c0_7 = arith.constant 0 : index
    %c0_8 = arith.constant 0 : index
    %c0_9 = arith.constant 0 : index
    %5 = vector.load %arg4[%c0_7, %c0_8, %c0_9] : memref<2x2x128xi32, #tpu.memory_space<vmem>>, vector<2x2x128xi32>
    %6 = arith.sitofp %5 : vector<2x2x128xi32> to vector<2x2x128xf32>
    %c0_i32 = arith.constant 0 : i32
    %7 = arith.cmpi eq, %arg0, %c0_i32 : i32
    %c0_i32_10 = arith.constant 0 : i32
    %8 = arith.cmpi eq, %arg1, %c0_i32_10 : i32
    %9 = arith.andi %7, %8 : i1
    %10 = arith.extui %9 : i1 to i32
    %c0_i32_11 = arith.constant 0 : i32
    %11 = arith.cmpi ne, %10, %c0_i32_11 : i32
    scf.if %11 {
      %cst = arith.constant 0.000000e+00 : f32
      %28 = vector.broadcast %cst : f32 to vector<9x2x1x128xf32>
      %c0_21 = arith.constant 0 : index
      %c0_22 = arith.constant 0 : index
      %c0_23 = arith.constant 0 : index
      %c0_24 = arith.constant 0 : index
      %29 = vector.load %arg6[%c0_21, %c0_22, %c0_23, %c0_24] : memref<9x2x1x128xf32, #tpu.memory_space<vmem>>, vector<9x2x1x128xf32>
      tpu.vector_store %arg6[%c0_21, %c0_22, %c0_23, %c0_24], %28 {strides = array<i32>} : memref<9x2x1x128xf32, #tpu.memory_space<vmem>>, vector<9x2x1x128xf32>,
    } else {
    }
    %c0_i32_12 = arith.constant 0 : i32
    %12 = arith.cmpi eq, %arg0, %c0_i32_12 : i32
    %13 = arith.extui %12 : i1 to i32
    %c0_i32_13 = arith.constant 0 : i32
    %14 = arith.cmpi ne, %13, %c0_i32_13 : i32
    scf.if %14 {
      %cst = arith.constant 2.000000e+00 : f32
      %28 = vector.broadcast %cst : f32 to vector<2x2x128xf32>
      %29 = arith.mulf %28, %6 : vector<2x2x128xf32>
      %cst_21 = arith.constant 1.000000e+00 : f32
      %30 = vector.broadcast %cst_21 : f32 to vector<2x2x128xf32>
      %31 = arith.subf %30, %29 : vector<2x2x128xf32>
      %32 = arith.mulf %31, %4 : vector<2x2x128xf32>
      %cst_22 = arith.constant 0.000000e+00 : f32
      %33 = vector.broadcast %cst_22 : f32 to vector<2x2x128xf32>
      %34 = arith.maximumf %32, %33 : vector<2x2x128xf32>
      %35 = math.absf %32 : vector<2x2x128xf32>
      %cst_23 = arith.constant 0.000000e+00 : f32
      %36 = vector.broadcast %cst_23 : f32 to vector<2x2x128xf32>
      %37 = arith.subf %36, %35 : vector<2x2x128xf32>
      %38 = math.exp %37 : vector<2x2x128xf32>
      %39 = math.log1p %38 : vector<2x2x128xf32>
      %40 = arith.addf %34, %39 : vector<2x2x128xf32>
      %c0_24 = arith.constant 0 : index
      %c0_25 = arith.constant 0 : index
      %c0_26 = arith.constant 0 : index
      %c0_27 = arith.constant 0 : index
      %41 = vector.load %arg6[%c0_24, %c0_25, %c0_26, %c0_27] : memref<9x2x1x128xf32, #tpu.memory_space<vmem>>, vector<1x2x1x128xf32>
      %42 = vector.shape_cast %41 : vector<1x2x1x128xf32> to vector<2x1x128xf32>
      %cst_28 = arith.constant dense<0.000000e+00> : vector<2x128xf32>
      %43 = vector.multi_reduction <add>, %40, %cst_28 [1] : vector<2x2x128xf32> to vector<2x128xf32>
      %44 = vector.shape_cast %43 : vector<2x128xf32> to vector<2x1x128xf32>
      %45 = arith.addf %42, %44 : vector<2x1x128xf32>
      %c0_29 = arith.constant 0 : index
      %c0_30 = arith.constant 0 : index
      %c0_31 = arith.constant 0 : index
      %c0_32 = arith.constant 0 : index
      %46 = vector.load %arg6[%c0_29, %c0_30, %c0_31, %c0_32] : memref<9x2x1x128xf32, #tpu.memory_space<vmem>>, vector<1x2x1x128xf32>
      %47 = vector.shape_cast %46 : vector<1x2x1x128xf32> to vector<2x1x128xf32>
      %48 = vector.shape_cast %45 : vector<2x1x128xf32> to vector<1x2x1x128xf32>
      tpu.vector_store %arg6[%c0_29, %c0_30, %c0_31, %c0_32], %48 {strides = array<i32>} : memref<9x2x1x128xf32, #tpu.memory_space<vmem>>, vector<1x2x1x128xf32>,
      %c1 = arith.constant 1 : index
      %c0_33 = arith.constant 0 : index
      %c0_34 = arith.constant 0 : index
      %c0_35 = arith.constant 0 : index
      %49 = vector.load %arg6[%c1, %c0_33, %c0_34, %c0_35] : memref<9x2x1x128xf32, #tpu.memory_space<vmem>>, vector<1x2x1x128xf32>
      %50 = vector.shape_cast %49 : vector<1x2x1x128xf32> to vector<2x1x128xf32>
      %51 = arith.mulf %6, %40 : vector<2x2x128xf32>
      %cst_36 = arith.constant dense<0.000000e+00> : vector<2x128xf32>
      %52 = vector.multi_reduction <add>, %51, %cst_36 [1] : vector<2x2x128xf32> to vector<2x128xf32>
      %53 = vector.shape_cast %52 : vector<2x128xf32> to vector<2x1x128xf32>
      %54 = arith.addf %50, %53 : vector<2x1x128xf32>
      %c1_37 = arith.constant 1 : index
      %c0_38 = arith.constant 0 : index
      %c0_39 = arith.constant 0 : index
      %c0_40 = arith.constant 0 : index
      %55 = vector.load %arg6[%c1_37, %c0_38, %c0_39, %c0_40] : memref<9x2x1x128xf32, #tpu.memory_space<vmem>>, vector<1x2x1x128xf32>
      %56 = vector.shape_cast %55 : vector<1x2x1x128xf32> to vector<2x1x128xf32>
      %57 = vector.shape_cast %54 : vector<2x1x128xf32> to vector<1x2x1x128xf32>
      tpu.vector_store %arg6[%c1_37, %c0_38, %c0_39, %c0_40], %57 {strides = array<i32>} : memref<9x2x1x128xf32, #tpu.memory_space<vmem>>, vector<1x2x1x128xf32>,
      %c2 = arith.constant 2 : index
      %c0_41 = arith.constant 0 : index
      %c0_42 = arith.constant 0 : index
      %c0_43 = arith.constant 0 : index
      %58 = vector.load %arg6[%c2, %c0_41, %c0_42, %c0_43] : memref<9x2x1x128xf32, #tpu.memory_space<vmem>>, vector<1x2x1x128xf32>
      %59 = vector.shape_cast %58 : vector<1x2x1x128xf32> to vector<2x1x128xf32>
      %cst_44 = arith.constant dense<0.000000e+00> : vector<2x128xf32>
      %60 = vector.multi_reduction <add>, %6, %cst_44 [1] : vector<2x2x128xf32> to vector<2x128xf32>
      %61 = vector.shape_cast %60 : vector<2x128xf32> to vector<2x1x128xf32>
      %62 = arith.addf %59, %61 : vector<2x1x128xf32>
      %c2_45 = arith.constant 2 : index
      %c0_46 = arith.constant 0 : index
      %c0_47 = arith.constant 0 : index
      %c0_48 = arith.constant 0 : index
      %63 = vector.load %arg6[%c2_45, %c0_46, %c0_47, %c0_48] : memref<9x2x1x128xf32, #tpu.memory_space<vmem>>, vector<1x2x1x128xf32>
      %64 = vector.shape_cast %63 : vector<1x2x1x128xf32> to vector<2x1x128xf32>
      %65 = vector.shape_cast %62 : vector<2x1x128xf32> to vector<1x2x1x128xf32>
      tpu.vector_store %arg6[%c2_45, %c0_46, %c0_47, %c0_48], %65 {strides = array<i32>} : memref<9x2x1x128xf32, #tpu.memory_space<vmem>>, vector<1x2x1x128xf32>,
      %c3 = arith.constant 3 : index
      %c0_49 = arith.constant 0 : index
      %c0_50 = arith.constant 0 : index
      %c0_51 = arith.constant 0 : index
      %66 = vector.load %arg6[%c3, %c0_49, %c0_50, %c0_51] : memref<9x2x1x128xf32, #tpu.memory_space<vmem>>, vector<1x2x1x128xf32>
      %67 = vector.shape_cast %66 : vector<1x2x1x128xf32> to vector<2x1x128xf32>
      %cst_52 = arith.constant dense<0.000000e+00> : vector<2x128xf32>
      %68 = vector.multi_reduction <add>, %4, %cst_52 [1] : vector<2x2x128xf32> to vector<2x128xf32>
      %69 = vector.shape_cast %68 : vector<2x128xf32> to vector<2x1x128xf32>
      %70 = arith.addf %67, %69 : vector<2x1x128xf32>
      %c3_53 = arith.constant 3 : index
      %c0_54 = arith.constant 0 : index
      %c0_55 = arith.constant 0 : index
      %c0_56 = arith.constant 0 : index
      %71 = vector.load %arg6[%c3_53, %c0_54, %c0_55, %c0_56] : memref<9x2x1x128xf32, #tpu.memory_space<vmem>>, vector<1x2x1x128xf32>
      %72 = vector.shape_cast %71 : vector<1x2x1x128xf32> to vector<2x1x128xf32>
      %73 = vector.shape_cast %70 : vector<2x1x128xf32> to vector<1x2x1x128xf32>
      tpu.vector_store %arg6[%c3_53, %c0_54, %c0_55, %c0_56], %73 {strides = array<i32>} : memref<9x2x1x128xf32, #tpu.memory_space<vmem>>, vector<1x2x1x128xf32>,
      %c4 = arith.constant 4 : index
      %c0_57 = arith.constant 0 : index
      %c0_58 = arith.constant 0 : index
      %c0_59 = arith.constant 0 : index
      %74 = vector.load %arg6[%c4, %c0_57, %c0_58, %c0_59] : memref<9x2x1x128xf32, #tpu.memory_space<vmem>>, vector<1x2x1x128xf32>
      %75 = vector.shape_cast %74 : vector<1x2x1x128xf32> to vector<2x1x128xf32>
      %76 = arith.mulf %4, %4 : vector<2x2x128xf32>
      %cst_60 = arith.constant dense<0.000000e+00> : vector<2x128xf32>
      %77 = vector.multi_reduction <add>, %76, %cst_60 [1] : vector<2x2x128xf32> to vector<2x128xf32>
      %78 = vector.shape_cast %77 : vector<2x128xf32> to vector<2x1x128xf32>
      %79 = arith.addf %75, %78 : vector<2x1x128xf32>
      %c4_61 = arith.constant 4 : index
      %c0_62 = arith.constant 0 : index
      %c0_63 = arith.constant 0 : index
      %c0_64 = arith.constant 0 : index
      %80 = vector.load %arg6[%c4_61, %c0_62, %c0_63, %c0_64] : memref<9x2x1x128xf32, #tpu.memory_space<vmem>>, vector<1x2x1x128xf32>
      %81 = vector.shape_cast %80 : vector<1x2x1x128xf32> to vector<2x1x128xf32>
      %82 = vector.shape_cast %79 : vector<2x1x128xf32> to vector<1x2x1x128xf32>
      tpu.vector_store %arg6[%c4_61, %c0_62, %c0_63, %c0_64], %82 {strides = array<i32>} : memref<9x2x1x128xf32, #tpu.memory_space<vmem>>, vector<1x2x1x128xf32>,
    } else {
    }
    %c0_i32_14 = arith.constant 0 : i32
    %15 = arith.cmpi eq, %arg0, %c0_i32_14 : i32
    %c0_i32_15 = arith.constant 0 : i32
    %16 = arith.cmpi eq, %arg1, %c0_i32_15 : i32
    %17 = arith.andi %15, %16 : i1
    %18 = arith.extui %17 : i1 to i32
    %c0_i32_16 = arith.constant 0 : i32
    %19 = arith.cmpi ne, %18, %c0_i32_16 : i32
    scf.if %19 {
      %c3 = arith.constant 3 : index
      %c0_21 = arith.constant 0 : index
      %c0_22 = arith.constant 0 : index
      %c0_23 = arith.constant 0 : index
      %28 = vector.load %arg6[%c3, %c0_21, %c0_22, %c0_23] : memref<9x2x1x128xf32, #tpu.memory_space<vmem>>, vector<1x2x1x128xf32>
      %29 = vector.shape_cast %28 : vector<1x2x1x128xf32> to vector<2x1x128xf32>
      %cst = arith.constant dense<0.000000e+00> : vector<2x1xf32>
      %30 = vector.multi_reduction <add>, %29, %cst [2] : vector<2x1x128xf32> to vector<2x1xf32>
      %31 = vector.shape_cast %30 : vector<2x1xf32> to vector<2x1x1xf32>
      %cst_24 = arith.constant dense<0.000000e+00> : vector<1x1xf32>
      %32 = vector.multi_reduction <add>, %31, %cst_24 [0] : vector<2x1x1xf32> to vector<1x1xf32>
      %33 = vector.shape_cast %32 : vector<1x1xf32> to vector<1x1x1xf32>
      %cst_25 = arith.constant 0.001953125 : f32
      %34 = vector.broadcast %cst_25 : f32 to vector<1x1x1xf32>
      %35 = arith.mulf %33, %34 : vector<1x1x1xf32>
      %c4 = arith.constant 4 : index
      %c0_26 = arith.constant 0 : index
      %c0_27 = arith.constant 0 : index
      %c0_28 = arith.constant 0 : index
      %36 = vector.load %arg6[%c4, %c0_26, %c0_27, %c0_28] : memref<9x2x1x128xf32, #tpu.memory_space<vmem>>, vector<1x2x1x128xf32>
      %37 = vector.shape_cast %36 : vector<1x2x1x128xf32> to vector<2x1x128xf32>
      %cst_29 = arith.constant dense<0.000000e+00> : vector<2x1xf32>
      %38 = vector.multi_reduction <add>, %37, %cst_29 [2] : vector<2x1x128xf32> to vector<2x1xf32>
      %39 = vector.shape_cast %38 : vector<2x1xf32> to vector<2x1x1xf32>
      %cst_30 = arith.constant dense<0.000000e+00> : vector<1x1xf32>
      %40 = vector.multi_reduction <add>, %39, %cst_30 [0] : vector<2x1x1xf32> to vector<1x1xf32>
      %41 = vector.shape_cast %40 : vector<1x1xf32> to vector<1x1x1xf32>
      %cst_31 = arith.constant 0.001953125 : f32
      %42 = vector.broadcast %cst_31 : f32 to vector<1x1x1xf32>
      %43 = arith.mulf %41, %42 : vector<1x1x1xf32>
      %44 = arith.mulf %35, %35 : vector<1x1x1xf32>
      %45 = arith.subf %43, %44 : vector<1x1x1xf32>
      %cst_32 = arith.constant 0.000000e+00 : f32
      %46 = vector.broadcast %cst_32 : f32 to vector<1x1x1xf32>
      %47 = arith.maximumf %45, %46 : vector<1x1x1xf32>
      %cst_33 = arith.constant 9.99999974E-6 : f32
      %48 = vector.broadcast %cst_33 : f32 to vector<1x1x1xf32>
      %49 = arith.addf %47, %48 : vector<1x1x1xf32>
      %50 = math.rsqrt %49 : vector<1x1x1xf32>
      %cst_34 = arith.constant 5.000000e-01 : f32
      %51 = vector.broadcast %cst_34 : f32 to vector<1x1x1xf32>
      %52 = arith.mulf %50, %51 : vector<1x1x1xf32>
      %53 = vector.shape_cast %35 : vector<1x1x1xf32> to vector<1x1x1xf32>
      %54 = vector.broadcast %53 : vector<1x1x1xf32> to vector<2x1x128xf32>
      %c7 = arith.constant 7 : index
      %c0_35 = arith.constant 0 : index
      %c0_36 = arith.constant 0 : index
      %c0_37 = arith.constant 0 : index
      %55 = vector.load %arg6[%c7, %c0_35, %c0_36, %c0_37] : memref<9x2x1x128xf32, #tpu.memory_space<vmem>>, vector<1x2x1x128xf32>
      %56 = vector.shape_cast %55 : vector<1x2x1x128xf32> to vector<2x1x128xf32>
      %57 = vector.shape_cast %54 : vector<2x1x128xf32> to vector<1x2x1x128xf32>
      tpu.vector_store %arg6[%c7, %c0_35, %c0_36, %c0_37], %57 {strides = array<i32>} : memref<9x2x1x128xf32, #tpu.memory_space<vmem>>, vector<1x2x1x128xf32>,
      %58 = vector.shape_cast %52 : vector<1x1x1xf32> to vector<1x1x1xf32>
      %59 = vector.broadcast %58 : vector<1x1x1xf32> to vector<2x1x128xf32>
      %c8 = arith.constant 8 : index
      %c0_38 = arith.constant 0 : index
      %c0_39 = arith.constant 0 : index
      %c0_40 = arith.constant 0 : index
      %60 = vector.load %arg6[%c8, %c0_38, %c0_39, %c0_40] : memref<9x2x1x128xf32, #tpu.memory_space<vmem>>, vector<1x2x1x128xf32>
      %61 = vector.shape_cast %60 : vector<1x2x1x128xf32> to vector<2x1x128xf32>
      %62 = vector.shape_cast %59 : vector<2x1x128xf32> to vector<1x2x1x128xf32>
      tpu.vector_store %arg6[%c8, %c0_38, %c0_39, %c0_40], %62 {strides = array<i32>} : memref<9x2x1x128xf32, #tpu.memory_space<vmem>>, vector<1x2x1x128xf32>,
    } else {
    }
    %c1_i32 = arith.constant 1 : i32
    %20 = arith.cmpi eq, %arg0, %c1_i32 : i32
    %21 = arith.extui %20 : i1 to i32
    %c0_i32_17 = arith.constant 0 : i32
    %22 = arith.cmpi ne, %21, %c0_i32_17 : i32
    scf.if %22 {
      %c7 = arith.constant 7 : index
      %c0_21 = arith.constant 0 : index
      %c0_22 = arith.constant 0 : index
      %c0_23 = arith.constant 0 : index
      %28 = vector.load %arg6[%c7, %c0_21, %c0_22, %c0_23] : memref<9x2x1x128xf32, #tpu.memory_space<vmem>>, vector<1x2x1x128xf32>
      %29 = vector.shape_cast %28 : vector<1x2x1x128xf32> to vector<2x1x128xf32>
      %c8 = arith.constant 8 : index
      %c0_24 = arith.constant 0 : index
      %c0_25 = arith.constant 0 : index
      %c0_26 = arith.constant 0 : index
      %30 = vector.load %arg6[%c8, %c0_24, %c0_25, %c0_26] : memref<9x2x1x128xf32, #tpu.memory_space<vmem>>, vector<1x2x1x128xf32>
      %31 = vector.shape_cast %30 : vector<1x2x1x128xf32> to vector<2x1x128xf32>
      %32 = vector.broadcast %29 : vector<2x1x128xf32> to vector<2x2x128xf32>
      %33 = arith.subf %4, %32 : vector<2x2x128xf32>
      %34 = vector.broadcast %31 : vector<2x1x128xf32> to vector<2x2x128xf32>
      %35 = arith.mulf %33, %34 : vector<2x2x128xf32>
      %cst = arith.constant 0.000000e+00 : f32
      %36 = vector.broadcast %cst : f32 to vector<2x2x128xf32>
      %37 = arith.addf %35, %36 : vector<2x2x128xf32>
      %38 = math.tanh %37 : vector<2x2x128xf32>
      %c5 = arith.constant 5 : index
      %c0_27 = arith.constant 0 : index
      %c0_28 = arith.constant 0 : index
      %c0_29 = arith.constant 0 : index
      %39 = vector.load %arg6[%c5, %c0_27, %c0_28, %c0_29] : memref<9x2x1x128xf32, #tpu.memory_space<vmem>>, vector<1x2x1x128xf32>
      %40 = vector.shape_cast %39 : vector<1x2x1x128xf32> to vector<2x1x128xf32>
      %cst_30 = arith.constant dense<0.000000e+00> : vector<2x128xf32>
      %41 = vector.multi_reduction <add>, %38, %cst_30 [1] : vector<2x2x128xf32> to vector<2x128xf32>
      %42 = vector.shape_cast %41 : vector<2x128xf32> to vector<2x1x128xf32>
      %43 = arith.addf %40, %42 : vector<2x1x128xf32>
      %c5_31 = arith.constant 5 : index
      %c0_32 = arith.constant 0 : index
      %c0_33 = arith.constant 0 : index
      %c0_34 = arith.constant 0 : index
      %44 = vector.load %arg6[%c5_31, %c0_32, %c0_33, %c0_34] : memref<9x2x1x128xf32, #tpu.memory_space<vmem>>, vector<1x2x1x128xf32>
      %45 = vector.shape_cast %44 : vector<1x2x1x128xf32> to vector<2x1x128xf32>
      %46 = vector.shape_cast %43 : vector<2x1x128xf32> to vector<1x2x1x128xf32>
      tpu.vector_store %arg6[%c5_31, %c0_32, %c0_33, %c0_34], %46 {strides = array<i32>} : memref<9x2x1x128xf32, #tpu.memory_space<vmem>>, vector<1x2x1x128xf32>,
      %c6 = arith.constant 6 : index
      %c0_35 = arith.constant 0 : index
      %c0_36 = arith.constant 0 : index
      %c0_37 = arith.constant 0 : index
      %47 = vector.load %arg6[%c6, %c0_35, %c0_36, %c0_37] : memref<9x2x1x128xf32, #tpu.memory_space<vmem>>, vector<1x2x1x128xf32>
      %48 = vector.shape_cast %47 : vector<1x2x1x128xf32> to vector<2x1x128xf32>
      %49 = arith.mulf %38, %6 : vector<2x2x128xf32>
      %cst_38 = arith.constant dense<0.000000e+00> : vector<2x128xf32>
      %50 = vector.multi_reduction <add>, %49, %cst_38 [1] : vector<2x2x128xf32> to vector<2x128xf32>
      %51 = vector.shape_cast %50 : vector<2x128xf32> to vector<2x1x128xf32>
      %52 = arith.addf %48, %51 : vector<2x1x128xf32>
      %c6_39 = arith.constant 6 : index
      %c0_40 = arith.constant 0 : index
      %c0_41 = arith.constant 0 : index
      %c0_42 = arith.constant 0 : index
      %53 = vector.load %arg6[%c6_39, %c0_40, %c0_41, %c0_42] : memref<9x2x1x128xf32, #tpu.memory_space<vmem>>, vector<1x2x1x128xf32>
      %54 = vector.shape_cast %53 : vector<1x2x1x128xf32> to vector<2x1x128xf32>
      %55 = vector.shape_cast %52 : vector<2x1x128xf32> to vector<1x2x1x128xf32>
      tpu.vector_store %arg6[%c6_39, %c0_40, %c0_41, %c0_42], %55 {strides = array<i32>} : memref<9x2x1x128xf32, #tpu.memory_space<vmem>>, vector<1x2x1x128xf32>,
    } else {
    }
    %c1_i32_18 = arith.constant 1 : i32
    %23 = arith.cmpi eq, %arg0, %c1_i32_18 : i32
    %c0_i32_19 = arith.constant 0 : i32
    %24 = arith.cmpi eq, %arg1, %c0_i32_19 : i32
    %25 = arith.andi %23, %24 : i1
    %26 = arith.extui %25 : i1 to i32
    %c0_i32_20 = arith.constant 0 : i32
    %27 = arith.cmpi ne, %26, %c0_i32_20 : i32
    scf.if %27 {
      %c0_21 = arith.constant 0 : index
      %c0_22 = arith.constant 0 : index
      %c0_23 = arith.constant 0 : index
      %c0_24 = arith.constant 0 : index
      %28 = vector.load %arg6[%c0_21, %c0_22, %c0_23, %c0_24] : memref<9x2x1x128xf32, #tpu.memory_space<vmem>>, vector<1x2x1x128xf32>
      %29 = vector.shape_cast %28 : vector<1x2x1x128xf32> to vector<2x1x128xf32>
      %cst = arith.constant dense<0.000000e+00> : vector<2x1xf32>
      %30 = vector.multi_reduction <add>, %29, %cst [2] : vector<2x1x128xf32> to vector<2x1xf32>
      %31 = vector.shape_cast %30 : vector<2x1xf32> to vector<2x1x1xf32>
      %cst_25 = arith.constant dense<0.000000e+00> : vector<1x1xf32>
      %32 = vector.multi_reduction <add>, %31, %cst_25 [0] : vector<2x1x1xf32> to vector<1x1xf32>
      %33 = vector.shape_cast %32 : vector<1x1xf32> to vector<1x1x1xf32>
      %c1 = arith.constant 1 : index
      %c0_26 = arith.constant 0 : index
      %c0_27 = arith.constant 0 : index
      %c0_28 = arith.constant 0 : index
      %34 = vector.load %arg6[%c1, %c0_26, %c0_27, %c0_28] : memref<9x2x1x128xf32, #tpu.memory_space<vmem>>, vector<1x2x1x128xf32>
      %35 = vector.shape_cast %34 : vector<1x2x1x128xf32> to vector<2x1x128xf32>
      %cst_29 = arith.constant dense<0.000000e+00> : vector<2x1xf32>
      %36 = vector.multi_reduction <add>, %35, %cst_29 [2] : vector<2x1x128xf32> to vector<2x1xf32>
      %37 = vector.shape_cast %36 : vector<2x1xf32> to vector<2x1x1xf32>
      %cst_30 = arith.constant dense<0.000000e+00> : vector<1x1xf32>
      %38 = vector.multi_reduction <add>, %37, %cst_30 [0] : vector<2x1x1xf32> to vector<1x1xf32>
      %39 = vector.shape_cast %38 : vector<1x1xf32> to vector<1x1x1xf32>
      %c2 = arith.constant 2 : index
      %c0_31 = arith.constant 0 : index
      %c0_32 = arith.constant 0 : index
      %c0_33 = arith.constant 0 : index
      %40 = vector.load %arg6[%c2, %c0_31, %c0_32, %c0_33] : memref<9x2x1x128xf32, #tpu.memory_space<vmem>>, vector<1x2x1x128xf32>
      %41 = vector.shape_cast %40 : vector<1x2x1x128xf32> to vector<2x1x128xf32>
      %cst_34 = arith.constant dense<0.000000e+00> : vector<2x1xf32>
      %42 = vector.multi_reduction <add>, %41, %cst_34 [2] : vector<2x1x128xf32> to vector<2x1xf32>
      %43 = vector.shape_cast %42 : vector<2x1xf32> to vector<2x1x1xf32>
      %cst_35 = arith.constant dense<0.000000e+00> : vector<1x1xf32>
      %44 = vector.multi_reduction <add>, %43, %cst_35 [0] : vector<2x1x1xf32> to vector<1x1xf32>
      %45 = vector.shape_cast %44 : vector<1x1xf32> to vector<1x1x1xf32>
      %c5 = arith.constant 5 : index
      %c0_36 = arith.constant 0 : index
      %c0_37 = arith.constant 0 : index
      %c0_38 = arith.constant 0 : index
      %46 = vector.load %arg6[%c5, %c0_36, %c0_37, %c0_38] : memref<9x2x1x128xf32, #tpu.memory_space<vmem>>, vector<1x2x1x128xf32>
      %47 = vector.shape_cast %46 : vector<1x2x1x128xf32> to vector<2x1x128xf32>
      %cst_39 = arith.constant dense<0.000000e+00> : vector<2x1xf32>
      %48 = vector.multi_reduction <add>, %47, %cst_39 [2] : vector<2x1x128xf32> to vector<2x1xf32>
      %49 = vector.shape_cast %48 : vector<2x1xf32> to vector<2x1x1xf32>
      %cst_40 = arith.constant dense<0.000000e+00> : vector<1x1xf32>
      %50 = vector.multi_reduction <add>, %49, %cst_40 [0] : vector<2x1x1xf32> to vector<1x1xf32>
      %51 = vector.shape_cast %50 : vector<1x1xf32> to vector<1x1x1xf32>
      %c6 = arith.constant 6 : index
      %c0_41 = arith.constant 0 : index
      %c0_42 = arith.constant 0 : index
      %c0_43 = arith.constant 0 : index
      %52 = vector.load %arg6[%c6, %c0_41, %c0_42, %c0_43] : memref<9x2x1x128xf32, #tpu.memory_space<vmem>>, vector<1x2x1x128xf32>
      %53 = vector.shape_cast %52 : vector<1x2x1x128xf32> to vector<2x1x128xf32>
      %cst_44 = arith.constant dense<0.000000e+00> : vector<2x1xf32>
      %54 = vector.multi_reduction <add>, %53, %cst_44 [2] : vector<2x1x128xf32> to vector<2x1xf32>
      %55 = vector.shape_cast %54 : vector<2x1xf32> to vector<2x1x1xf32>
      %cst_45 = arith.constant dense<0.000000e+00> : vector<1x1xf32>
      %56 = vector.multi_reduction <add>, %55, %cst_45 [0] : vector<2x1x1xf32> to vector<1x1xf32>
      %57 = vector.shape_cast %56 : vector<1x1xf32> to vector<1x1x1xf32>
      %cst_46 = arith.constant 3.500000e+01 : f32
      %58 = vector.broadcast %cst_46 : f32 to vector<1x1x1xf32>
      %59 = arith.mulf %58, %45 : vector<1x1x1xf32>
      %cst_47 = arith.constant 5.120000e+02 : f32
      %60 = vector.broadcast %cst_47 : f32 to vector<1x1x1xf32>
      %61 = arith.addf %60, %59 : vector<1x1x1xf32>
      %cst_48 = arith.constant 1.000000e+00 : f32
      %62 = vector.broadcast %cst_48 : f32 to vector<1x1x1xf32>
      %63 = arith.mulf %62, %33 : vector<1x1x1xf32>
      %cst_49 = arith.constant 3.500000e+01 : f32
      %64 = vector.broadcast %cst_49 : f32 to vector<1x1x1xf32>
      %65 = arith.mulf %64, %39 : vector<1x1x1xf32>
      %66 = arith.addf %63, %65 : vector<1x1x1xf32>
      %67 = arith.divf %66, %61 : vector<1x1x1xf32>
      %cst_50 = arith.constant 5.000000e-01 : f32
      %68 = vector.broadcast %cst_50 : f32 to vector<1x1x1xf32>
      %69 = arith.mulf %68, %51 : vector<1x1x1xf32>
      %cst_51 = arith.constant 2.560000e+02 : f32
      %70 = vector.broadcast %cst_51 : f32 to vector<1x1x1xf32>
      %71 = arith.addf %69, %70 : vector<1x1x1xf32>
      %cst_52 = arith.constant 5.000000e-01 : f32
      %72 = vector.broadcast %cst_52 : f32 to vector<1x1x1xf32>
      %73 = arith.mulf %72, %57 : vector<1x1x1xf32>
      %cst_53 = arith.constant 5.000000e-01 : f32
      %74 = vector.broadcast %cst_53 : f32 to vector<1x1x1xf32>
      %75 = arith.mulf %74, %45 : vector<1x1x1xf32>
      %76 = arith.addf %73, %75 : vector<1x1x1xf32>
      %77 = arith.addf %71, %45 : vector<1x1x1xf32>
      %78 = arith.subf %77, %76 : vector<1x1x1xf32>
      %79 = arith.divf %76, %78 : vector<1x1x1xf32>
      %cst_54 = arith.constant 1.000000e+00 : f32
      %80 = vector.broadcast %cst_54 : f32 to vector<1x1x1xf32>
      %81 = arith.subf %80, %79 : vector<1x1x1xf32>
      %cst_55 = arith.constant 6.700000e-01 : f32
      %82 = vector.broadcast %cst_55 : f32 to vector<1x1x1xf32>
      %83 = arith.mulf %82, %81 : vector<1x1x1xf32>
      %cst_56 = arith.constant 3.300000e-01 : f32
      %84 = vector.broadcast %cst_56 : f32 to vector<1x1x1xf32>
      %85 = arith.mulf %84, %67 : vector<1x1x1xf32>
      %86 = arith.addf %83, %85 : vector<1x1x1xf32>
      %87 = vector.shape_cast %86 : vector<1x1x1xf32> to vector<1x1xf32>
      %c0_57 = arith.constant 0 : index
      %c0_58 = arith.constant 0 : index
      %88 = vector.load %arg5[%c0_57, %c0_58] : memref<1x1xf32, #tpu.memory_space<vmem>>, vector<1x1xf32>
      tpu.vector_store %arg5[%c0_57, %c0_58], %87 {strides = array<i32>} : memref<1x1xf32, #tpu.memory_space<vmem>>, vector<1x1xf32>,
    } else {
    }
    return
  }
  func.func @transform_0(%arg0: i32, %arg1: i32) -> (i32, i32, i32, i32) {
    %c0_i32 = arith.constant 0 : i32
    %c0_i32_0 = arith.constant 0 : i32
    %c0_i32_1 = arith.constant 0 : i32
    %c0_i32_2 = arith.constant 0 : i32
    return %c0_i32, %c0_i32_0, %arg1, %c0_i32_1 : i32, i32, i32, i32
  }
  func.func @transform_1(%arg0: i32, %arg1: i32) -> (i32, i32, i32, i32) {
    %c0_i32 = arith.constant 0 : i32
    %c1_i32 = arith.constant 1 : i32
    %c0_i32_0 = arith.constant 0 : i32
    %c0_i32_1 = arith.constant 0 : i32
    return %c0_i32, %c1_i32, %arg1, %c0_i32_0 : i32, i32, i32, i32
  }
  func.func @transform_2(%arg0: i32, %arg1: i32) -> (i32, i32, i32) {
    %c0_i32 = arith.constant 0 : i32
    %c0_i32_0 = arith.constant 0 : i32
    %c0_i32_1 = arith.constant 0 : i32
    return %c0_i32, %arg1, %c0_i32_0 : i32, i32, i32
  }
  func.func @transform_3(%arg0: i32, %arg1: i32) -> (i32, i32) {
    %c0_i32 = arith.constant 0 : i32
    %c0_i32_0 = arith.constant 0 : i32
    %c0_i32_1 = arith.constant 0 : i32
    return %c0_i32, %c0_i32_0 : i32, i32
  }
}

</mosaic_0001>

<llo_original>
// kernel: loss_ce_iou.1
$region0: #{loss_ce_iou.1}
  #allocation0 [shape = 'u32[]', space=smem, size = 0x4, offset = 0x4, fixed_abs, tag = 'smem constant byte address 0x4 - core index']
  #allocation1 [shape = 'u32[144,128]{1,0:T(1,128)}', space=vmem, size = 0x12000, scoped, tag = 'internal scratch']
  #allocation2 [shape = 'f32[9,2,1,128]{3,2,1,0:T(1,128)}', space=vmem, size = 0x2400, scoped, tag = 'scratch operand']
  %s0 = inlined_call_operand.vmem [shape: f32[2,2,2,128], index: 0, kind: input, shape index: {}, may-alias: {0,1}]
  %s1 = inlined_call_operand.vmem [shape: f32[2,2,2,128], index: 1, kind: input, shape index: {}, may-alias: {0,1}]
  %s2 = inlined_call_operand.vmem [shape: s32[2,2,128], index: 2, kind: input, shape index: {}]
  %s3 = inlined_call_operand.hbm [shape: f32[1,1], index: 3, kind: output, shape index: {}]
  %s4 = sld [smem:[#allocation0]]
  $region133: #{loss_ce_iou.1} parent=0
    _
  %s6 = ssub.s32 1, %s4
  %s7 = scalar_select 0, %s6, %s4
  $region1: #{loss_ce_iou.1} parent=0
    #allocation3 [shape = 'u8[2048]{0}', space=vmem, size = 0x800, scoped, tag = 'input window, operand 0, single buffered']
    #allocation4 [shape = 'u8[2048]{0}', space=vmem, size = 0x800, scoped, tag = 'input window, operand 1, single buffered']
    #allocation5 [shape = 'u8[512]{0}', space=vmem, size = 0x400, scoped, tag = 'output window, operand 0, single buffered']
    #allocation6 [shape = 's32[2]{0}', space=sflag, size = 0x8, scoped, tag = 'scoped memory for loss_ce_iou.1']
    %8 = vsyncpa [#allocation6], 0
    loop: start=0, step=1, limit=4
    $region2: #{loss_ce_iou.1} parent=1 // loop_pre_header
      _
    $region3: #{loss_ce_iou.1} parent=1 // loop_header
      %s10 = sphi 0, %s14
      %p11 = scmp.ge.s32.totalorder %s10, 4
      %s17 = sphi 0, %s29
      %s18 = sphi 0, %s25
      %s19 = sphi 0, %s17
      %s20 = sphi 0, %s18
      %s21 = sphi 0, %s19
      %s22 = sphi 0, %s20
      %s32 = sphi 0, %s34
      %s35 = sphi 0, %s32
      %s36 = sphi 0, %s35
      %s52 = sphi 0, %s36
      %s58 = sphi 0, %s60
      %s61 = sphi 0, %s58
      %s62 = sphi 0, %s61
      %s78 = sphi 0, %s62
      %s84 = sphi 0, %s86
      %s87 = sphi 0, %s84
      %s88 = sphi 0, %s87
      %s104 = sphi 0, %s88
      %s108 = sphi 0, %s108
      %s110 = sphi 0, %s108
      %s111 = sphi 0, %s110
      %s125 = sphi 0, %s111
    $region4: #{loss_ce_iou.1} parent=1 // loop_header_branch
      %13 = sbr.rel (%p11) target = $region8
    $region5: #{loss_ce_iou.1} parent=1 // loop_body
      %s15 = ssub.s32 %s10, 1
      %s16 = ssub.s32 %s10, 2
      %s23 = sadd.s32 1, %s18
      %p24 = scmp.ge.s32.totalorder %s23, 1
      %s25 = scalar_select %p24, 0, %s23
      %s26 = sadd.s32 1, %s17
      %s27 = scalar_select %p24, %s26, %s17
      %p28 = scmp.ge.s32.totalorder %s27, 2
      %s29 = scalar_select %p28, 0, %s27
      %s30 = ssub.s32 %s18, %s25
      %p31 = scmp.eq.s32.totalorder %s30, 0
      %s33 = sadd.s32 %s32, 1
      %s34 = scalar_select %p31, %s32, %s33
      %p37 = pneg %p31
      %p38 = scmp.eq.s32.totalorder %s10, 1
      %p39 = por %p37, %p38
      %p40 = scmp.ne.s32.totalorder %s32, %s35
      %p41 = scmp.eq.s32.totalorder %s10, 0
      %p42 = por %p40, %p41
      %p43 = scmp.ne.s32.totalorder %s32, %s35
      %p44 = scmp.eq.s32.totalorder %s15, 1
      %p45 = por %p43, %p44
      %p46 = scmp.ne.s32.totalorder %s35, %s36
      %p47 = scmp.eq.s32.totalorder %s15, 0
      %p48 = por %p46, %p47
      %p49 = scmp.ne.s32.totalorder %s35, %s36
      %p50 = scmp.eq.s32.totalorder %s16, 1
      %p51 = por %p49, %p50
      %p53 = scmp.ne.s32.totalorder %s36, %s52
      %p54 = scmp.eq.s32.totalorder %s16, 0
      %p55 = por %p53, %p54
      %s56 = ssub.s32 %s18, %s25
      %p57 = scmp.eq.s32.totalorder %s56, 0
      %s59 = sadd.s32 %s58, 1
      %s60 = scalar_select %p57, %s58, %s59
      %p63 = pneg %p57
      %p64 = scmp.eq.s32.totalorder %s10, 1
      %p65 = por %p63, %p64
      %p66 = scmp.ne.s32.totalorder %s58, %s61
      %p67 = scmp.eq.s32.totalorder %s10, 0
      %p68 = por %p66, %p67
      %p69 = scmp.ne.s32.totalorder %s58, %s61
      %p70 = scmp.eq.s32.totalorder %s15, 1
      %p71 = por %p69, %p70
      %p72 = scmp.ne.s32.totalorder %s61, %s62
      %p73 = scmp.eq.s32.totalorder %s15, 0
      %p74 = por %p72, %p73
      %p75 = scmp.ne.s32.totalorder %s61, %s62
      %p76 = scmp.eq.s32.totalorder %s16, 1
      %p77 = por %p75, %p76
      %p79 = scmp.ne.s32.totalorder %s62, %s78
      %p80 = scmp.eq.s32.totalorder %s16, 0
      %p81 = por %p79, %p80
      %s82 = ssub.s32 %s18, %s25
      %p83 = scmp.eq.s32.totalorder %s82, 0
      %s85 = sadd.s32 %s84, 1
      %s86 = scalar_select %p83, %s84, %s85
      %p89 = pneg %p83
      %p90 = scmp.eq.s32.totalorder %s10, 1
      %p91 = por %p89, %p90
      %p92 = scmp.ne.s32.totalorder %s84, %s87
      %p93 = scmp.eq.s32.totalorder %s10, 0
      %p94 = por %p92, %p93
      %p95 = scmp.ne.s32.totalorder %s84, %s87
      %p96 = scmp.eq.s32.totalorder %s15, 1
      %p97 = por %p95, %p96
      %p98 = scmp.ne.s32.totalorder %s87, %s88
      %p99 = scmp.eq.s32.totalorder %s15, 0
      %p100 = por %p98, %p99
      %p101 = scmp.ne.s32.totalorder %s87, %s88
      %p102 = scmp.eq.s32.totalorder %s16, 1
      %p103 = por %p101, %p102
      %p105 = scmp.ne.s32.totalorder %s88, %s104
      %p106 = scmp.eq.s32.totalorder %s16, 0
      %p107 = por %p105, %p106
      %s109 = sadd.s32 %s108, 1
      %p112 = scmp.eq.s32.totalorder %s10, 1
      %p113 = scmp.ne.s32.totalorder %s108, %s110
      %p114 = scmp.eq.s32.totalorder %s10, 0
      %p115 = por %p113, %p114
      %p116 = scmp.ne.s32.totalorder %s108, %s110
      %p117 = scmp.eq.s32.totalorder %s15, 1
      %p118 = por %p116, %p117
      %p119 = scmp.ne.s32.totalorder %s110, %s111
      %p120 = scmp.eq.s32.totalorder %s15, 0
      %p121 = por %p119, %p120
      %p122 = scmp.ne.s32.totalorder %s110, %s111
      %p123 = scmp.eq.s32.totalorder %s16, 1
      %p124 = por %p122, %p123
      %p126 = scmp.ne.s32.totalorder %s111, %s125
      %p127 = scmp.eq.s32.totalorder %s16, 0
      %p128 = por %p126, %p127
      %p129 = scmp.le.s32.totalorder 1, %s10
      %p130 = scmp.lt.s32.totalorder %s10, 3
      %p131 = pnand %p129, %p130
      %p132 = pneg %p131
      // Predicated region
      $region9: #{loss_ce_iou.1} parent=5 // pred_check
        _
      $region10: #{loss_ce_iou.1} parent=5 // pred_check_branch
        %134 = sbr.rel (%p131) target = $region12
      $region11: #{loss_ce_iou.1} parent=5 // pred_region
        %s135 = ssub.s32 %s10, 1
        // Predicated region
        $region13: #{loss_ce_iou.1} parent=11 // pred_check
          %p136 = pneg %p48
        $region14: #{loss_ce_iou.1} parent=11 // pred_check_branch
          %138 = sbr.rel (%p136) target = $region16
        $region15: #{loss_ce_iou.1} parent=11 // pred_region
          %s139 = smul.addr %s20, 2
          %s140 = scalar_lea.vmem %s0, %s139
          // Predicated region
          $region17: #{loss_ce_iou.1} parent=15 // pred_check
            _
          $region18: #{loss_ce_iou.1} parent=15 // pred_check_branch
            %142 = sbr.rel (0) target = $region20
          $region19: #{loss_ce_iou.1} parent=15 // pred_region
            // Predicated region
            $region21: #{loss_ce_iou.1} parent=19 // pred_check
              _
            $region22: #{loss_ce_iou.1} parent=19 // pred_check_branch
              %144 = sbr.rel target = $region24
            $region23: #{loss_ce_iou.1} parent=19 // pred_region
              // Predicated region
              $region36: #{loss_ce_iou.1} parent=23 // pred_check
                _
              $region37: #{loss_ce_iou.1} parent=23 // pred_check_branch
                %161 = sbr.rel (0) target = $region39
              $region38: #{loss_ce_iou.1} parent=23 // pred_region
                loop: start=0, step=1, limit=1
                $region40: #{loss_ce_iou.1} parent=38 // loop_pre_header
                  _
                $region41: #{loss_ce_iou.1} parent=38 // loop_header
                  %s164 = sphi 0, %s168
                  %p165 = scmp.ge.s32.totalorder %s164, 1
                  %s169 = sphi %s140, %s140
                  %s170 = sphi [#allocation3], [#allocation3]
                $region42: #{loss_ce_iou.1} parent=38 // loop_header_branch
                  %167 = sbr.rel (%p165) target = $region46
                $region43: #{loss_ce_iou.1} parent=38 // loop_body
                  %v171 = vld [vmem:[%s169] sm:$0x3]
                  %172 = vst [vmem:[%s170] sm:$0x3] %v171
                  %v173 = vld [vmem:[%s169 + $0x4] sm:$0x3]
                  %174 = vst [vmem:[%s170 + $0x2] sm:$0x3] %v173
                $region44: #{loss_ce_iou.1} parent=38 // loop_footer
                  %s168 = sadd.s32 1, %s164
                $region45: #{loss_ce_iou.1} parent=38 // loop_footer_branch
                  %163 = sbr.rel target = $region41
                $region46: #{loss_ce_iou.1} parent=38 // loop_exit
                  _
              $region39: #{loss_ce_iou.1} parent=23 // pred_fallthru
                _
            $region24: #{loss_ce_iou.1} parent=19 // pred_fallthru
              _
            // Predicated region
            $region25: #{loss_ce_iou.1} parent=19 // pred_check
              _
            $region26: #{loss_ce_iou.1} parent=19 // pred_check_branch
              %146 = sbr.rel (0) target = $region28
            $region27: #{loss_ce_iou.1} parent=19 // pred_region
              loop: start=0, step=1, limit=1
              $region29: #{loss_ce_iou.1} parent=27 // loop_pre_header
                _
              $region30: #{loss_ce_iou.1} parent=27 // loop_header
                %s149 = sphi 0, %s153
                %p150 = scmp.ge.s32.totalorder %s149, 1
                %s154 = sphi %s140, %s140
                %s155 = sphi [#allocation3], [#allocation3]
              $region31: #{loss_ce_iou.1} parent=27 // loop_header_branch
                %152 = sbr.rel (%p150) target = $region35
              $region32: #{loss_ce_iou.1} parent=27 // loop_body
                %v156 = vld [vmem:[%s154] sm:$0x3]
                %157 = vst [vmem:[%s155] sm:$0x3] %v156
                %v158 = vld [vmem:[%s154 + $0x4] sm:$0x3]
                %159 = vst [vmem:[%s155 + $0x2] sm:$0x3] %v158
              $region33: #{loss_ce_iou.1} parent=27 // loop_footer
                %s153 = sadd.s32 1, %s149
              $region34: #{loss_ce_iou.1} parent=27 // loop_footer_branch
                %148 = sbr.rel target = $region30
              $region35: #{loss_ce_iou.1} parent=27 // loop_exit
                _
            $region28: #{loss_ce_iou.1} parent=19 // pred_fallthru
              _
          $region20: #{loss_ce_iou.1} parent=15 // pred_fallthru
            _
          %175 = vnop
        $region16: #{loss_ce_iou.1} parent=11 // pred_fallthru
          _
        // Predicated region
        $region47: #{loss_ce_iou.1} parent=11 // pred_check
          %p176 = pneg %p74
        $region48: #{loss_ce_iou.1} parent=11 // pred_check_branch
          %178 = sbr.rel (%p176) target = $region50
        $region49: #{loss_ce_iou.1} parent=11 // pred_region
          %s179 = sadd.s32 %s20, 1
          %s180 = smul.addr %s179, 2
          %s181 = scalar_lea.vmem %s1, %s180
          // Predicated region
          $region51: #{loss_ce_iou.1} parent=49 // pred_check
            _
          $region52: #{loss_ce_iou.1} parent=49 // pred_check_branch
            %183 = sbr.rel (0) target = $region54
          $region53: #{loss_ce_iou.1} parent=49 // pred_region
            // Predicated region
            $region55: #{loss_ce_iou.1} parent=53 // pred_check
              _
            $region56: #{loss_ce_iou.1} parent=53 // pred_check_branch
              %185 = sbr.rel target = $region58
            $region57: #{loss_ce_iou.1} parent=53 // pred_region
              // Predicated region
              $region70: #{loss_ce_iou.1} parent=57 // pred_check
                _
              $region71: #{loss_ce_iou.1} parent=57 // pred_check_branch
                %202 = sbr.rel (0) target = $region73
              $region72: #{loss_ce_iou.1} parent=57 // pred_region
                loop: start=0, step=1, limit=1
                $region74: #{loss_ce_iou.1} parent=72 // loop_pre_header
                  _
                $region75: #{loss_ce_iou.1} parent=72 // loop_header
                  %s205 = sphi 0, %s209
                  %p206 = scmp.ge.s32.totalorder %s205, 1
                  %s210 = sphi %s181, %s181
                  %s211 = sphi [#allocation4], [#allocation4]
                $region76: #{loss_ce_iou.1} parent=72 // loop_header_branch
                  %208 = sbr.rel (%p206) target = $region80
                $region77: #{loss_ce_iou.1} parent=72 // loop_body
                  %v212 = vld [vmem:[%s210] sm:$0x3]
                  %213 = vst [vmem:[%s211] sm:$0x3] %v212
                  %v214 = vld [vmem:[%s210 + $0x4] sm:$0x3]
                  %215 = vst [vmem:[%s211 + $0x2] sm:$0x3] %v214
                $region78: #{loss_ce_iou.1} parent=72 // loop_footer
                  %s209 = sadd.s32 1, %s205
                $region79: #{loss_ce_iou.1} parent=72 // loop_footer_branch
                  %204 = sbr.rel target = $region75
                $region80: #{loss_ce_iou.1} parent=72 // loop_exit
                  _
              $region73: #{loss_ce_iou.1} parent=57 // pred_fallthru
                _
            $region58: #{loss_ce_iou.1} parent=53 // pred_fallthru
              _
            // Predicated region
            $region59: #{loss_ce_iou.1} parent=53 // pred_check
              _
            $region60: #{loss_ce_iou.1} parent=53 // pred_check_branch
              %187 = sbr.rel (0) target = $region62
            $region61: #{loss_ce_iou.1} parent=53 // pred_region
              loop: start=0, step=1, limit=1
              $region63: #{loss_ce_iou.1} parent=61 // loop_pre_header
                _
              $region64: #{loss_ce_iou.1} parent=61 // loop_header
                %s190 = sphi 0, %s194
                %p191 = scmp.ge.s32.totalorder %s190, 1
                %s195 = sphi %s181, %s181
                %s196 = sphi [#allocation4], [#allocation4]
              $region65: #{loss_ce_iou.1} parent=61 // loop_header_branch
                %193 = sbr.rel (%p191) target = $region69
              $region66: #{loss_ce_iou.1} parent=61 // loop_body
                %v197 = vld [vmem:[%s195] sm:$0x3]
                %198 = vst [vmem:[%s196] sm:$0x3] %v197
                %v199 = vld [vmem:[%s195 + $0x4] sm:$0x3]
                %200 = vst [vmem:[%s196 + $0x2] sm:$0x3] %v199
              $region67: #{loss_ce_iou.1} parent=61 // loop_footer
                %s194 = sadd.s32 1, %s190
              $region68: #{loss_ce_iou.1} parent=61 // loop_footer_branch
                %189 = sbr.rel target = $region64
              $region69: #{loss_ce_iou.1} parent=61 // loop_exit
                _
            $region62: #{loss_ce_iou.1} parent=53 // pred_fallthru
              _
          $region54: #{loss_ce_iou.1} parent=49 // pred_fallthru
            _
          %216 = vnop
        $region50: #{loss_ce_iou.1} parent=11 // pred_fallthru
          _
        // Predicated region
        $region81: #{loss_ce_iou.1} parent=11 // pred_check
          %p217 = pneg %p100
        $region82: #{loss_ce_iou.1} parent=11 // pred_check_branch
          %219 = sbr.rel (%p217) target = $region84
        $region83: #{loss_ce_iou.1} parent=11 // pred_region
          %p220 = scmp.lt.s32.totalorder %s20, 0
          %s221 = scalar_select %p220, %s20, 0
          %s222 = smul.addr %s221, 2
          %s223 = scalar_lea.vmem %s2, %s222
        $region84: #{loss_ce_iou.1} parent=11 // pred_fallthru
          _
      $region12: #{loss_ce_iou.1} parent=5 // pred_fallthru
        _
      %p224 = scmp.lt.s32.totalorder %s10, 2
      // Predicated region
      $region85: #{loss_ce_iou.1} parent=5 // pred_check
        %p225 = pneg %p224
      $region86: #{loss_ce_iou.1} parent=5 // pred_check_branch
        %227 = sbr.rel (%p225) target = $region88
      $region87: #{loss_ce_iou.1} parent=5 // pred_region
        _
      $region88: #{loss_ce_iou.1} parent=5 // pred_fallthru
        _
      %p228 = scmp.le.s32.totalorder 1, %s10
      %p229 = scmp.lt.s32.totalorder %s10, 3
      %p230 = pnand %p228, %p229
      %p231 = pneg %p230
      // Predicated region
      $region89: #{loss_ce_iou.1} parent=5 // pred_check
        _
      $region90: #{loss_ce_iou.1} parent=5 // pred_check_branch
        %233 = sbr.rel (%p230) target = $region92
      $region91: #{loss_ce_iou.1} parent=5 // pred_region
        %s234 = ssub.s32 %s10, 1
        // Predicated region
        $region93: #{loss_ce_iou.1} parent=91 // pred_check
          %p235 = pneg %p48
        $region94: #{loss_ce_iou.1} parent=91 // pred_check_branch
          %237 = sbr.rel (%p235) target = $region96
        $region95: #{loss_ce_iou.1} parent=91 // pred_region
          _
        $region96: #{loss_ce_iou.1} parent=91 // pred_fallthru
          _
        // Predicated region
        $region97: #{loss_ce_iou.1} parent=91 // pred_check
          %p238 = pneg %p74
        $region98: #{loss_ce_iou.1} parent=91 // pred_check_branch
          %240 = sbr.rel (%p238) target = $region100
        $region99: #{loss_ce_iou.1} parent=91 // pred_region
          _
        $region100: #{loss_ce_iou.1} parent=91 // pred_fallthru
          _
        %p241 = pneg %p48
        %p242 = pneg %p45
        %p243 = pneg %p74
        %p244 = pneg %p71
        %p245 = scmp.lt.s32.totalorder %s20, 0
        %s246 = scalar_select %p245, %s20, 0
        %s247 = smul.addr %s246, 2
        %s248 = scalar_lea.vmem %s2, %s247
        %p249 = pneg %p100
        %p250 = pneg %p97
        %p251 = pneg %p121
        %p252 = pneg %p118
        %p253 = scmp.lt.s32.totalorder %s20, 0
        %s254 = scalar_select %p253, %s20, 0
        %s255 = smul.addr %s254, 2
        %s256 = scalar_lea.vmem %s2, %s255
        %v257 = vld [vmem:[#allocation3] sm:$0x3]
        %v258 = vld [vmem:[#allocation3 + $0x2] sm:$0x3]
        %v259 = vld [vmem:[#allocation4] sm:$0x3]
        %v260 = vld [vmem:[#allocation4 + $0x2] sm:$0x3]
        %v261 = vsub.f32 %v259, %v257
        %v262 = vsub.f32 %v260, %v258
        %v263 = vld [vmem:[%s256] sm:$0x3]
        %v264 = vld [vmem:[%s256 + $0x2] sm:$0x3]
        %v265 = vcvt.s32.f32 %v263
        %v266 = vcvt.s32.f32 %v264
        %p267 = scmp.eq.s32.totalorder %s19, 0
        %p268 = scmp.eq.s32.totalorder %s20, 0
        %p269 = pnand %p267, %p268
        %p270 = pneg %p269
        // Predicated region
        $region101: #{loss_ce_iou.1} parent=91 // pred_check
          _
        $region102: #{loss_ce_iou.1} parent=91 // pred_check_branch
          %272 = sbr.rel (%p269) target = $region104
        $region103: #{loss_ce_iou.1} parent=91 // pred_region
          %273 = vst [vmem:[#allocation2] sm:$0x1] 0.0
          %274 = vst [vmem:[#allocation2 + $0x1] sm:$0x1] 0.0
          %275 = vst [vmem:[#allocation2 + $0x2] sm:$0x1] 0.0
          %276 = vst [vmem:[#allocation2 + $0x3] sm:$0x1] 0.0
          %277 = vst [vmem:[#allocation2 + $0x4] sm:$0x1] 0.0
          %278 = vst [vmem:[#allocation2 + $0x5] sm:$0x1] 0.0
          %279 = vst [vmem:[#allocation2 + $0x6] sm:$0x1] 0.0
          %280 = vst [vmem:[#allocation2 + $0x7] sm:$0x1] 0.0
          %281 = vst [vmem:[#allocation2 + $0x8] sm:$0x1] 0.0
          %282 = vst [vmem:[#allocation2 + $0x9] sm:$0x1] 0.0
          %283 = vst [vmem:[#allocation2 + $0xa] sm:$0x1] 0.0
          %284 = vst [vmem:[#allocation2 + $0xb] sm:$0x1] 0.0
          %285 = vst [vmem:[#allocation2 + $0xc] sm:$0x1] 0.0
          %286 = vst [vmem:[#allocation2 + $0xd] sm:$0x1] 0.0
          %287 = vst [vmem:[#allocation2 + $0xe] sm:$0x1] 0.0
          %288 = vst [vmem:[#allocation2 + $0xf] sm:$0x1] 0.0
          %289 = vst [vmem:[#allocation2 + $0x10] sm:$0x1] 0.0
          %290 = vst [vmem:[#allocation2 + $0x11] sm:$0x1] 0.0
        $region104: #{loss_ce_iou.1} parent=91 // pred_fallthru
          _
        // Predicated region
        $region105: #{loss_ce_iou.1} parent=91 // pred_check
          %p291 = pneg %p267
        $region106: #{loss_ce_iou.1} parent=91 // pred_check_branch
          %293 = sbr.rel (%p291) target = $region108
        $region107: #{loss_ce_iou.1} parent=91 // pred_region
          %v294 = vmul.f32 %v265, 2.0
          %v295 = vmul.f32 %v266, 2.0
          %v296 = vsub.f32 1.0, %v294
          %v297 = vsub.f32 1.0, %v295
          %v298 = vmul.f32 %v296, %v261
          %v299 = vmul.f32 %v297, %v262
          %v300 = vmax.f32 %v298, 0.0
          %v301 = vmax.f32 %v299, 0.0
          %v302 = vand.u32 2147483647, %v298
          %v303 = vand.u32 2147483647, %v299
          %v304 = vsub.f32 0.0, %v302
          %v305 = vsub.f32 0.0, %v303
          %v306 = vmul.f32 %v304, 1.442695
          %v307 = vpow.pop %v306
          %v308 = vmul.f32 %v305, 1.442695
          %v309 = vpow.pop %v308
          %v310 = vadd.f32 %v307, 1.0
          %v311 = vlog2.pop %v310
          %v312 = vmul.f32 %v311, 0.6931472
          %v313 = vmul.f32 -0.5, %v307
          %v314 = vadd.f32 %v313, 1.0
          %v315 = vmul.f32 %v314, %v307
          %v316 = vand.u32 2147483647, %v307
          %vm317 = vcmp.lt.f32.partialorder %v316, 0.0004427343
          %v318 = vsel %vm317, %v315, %v312
          %v319 = vadd.f32 %v309, 1.0
          %v320 = vlog2.pop %v319
          %v321 = vmul.f32 %v320, 0.6931472
          %v322 = vmul.f32 -0.5, %v309
          %v323 = vadd.f32 %v322, 1.0
          %v324 = vmul.f32 %v323, %v309
          %v325 = vand.u32 2147483647, %v309
          %vm326 = vcmp.lt.f32.partialorder %v325, 0.0004427343
          %v327 = vsel %vm326, %v324, %v321
          %v328 = vadd.f32 %v300, %v318
          %v329 = vadd.f32 %v301, %v327
          %v330 = vld [vmem:[#allocation2] sm:$0x1]
          %v331 = vld [vmem:[#allocation2 + $0x1] sm:$0x1]
          %vm332 = vcmask 1041408
          %v333 = vsel %vm332, %v328, 0.0
          %v334 = vrot.slane %v333, 4
          %v335 = vadd.f32 %v333, %v334
          %v336 = vrot.slane %v335, 2
          %v337 = vadd.f32 %v335, %v336
          %v338 = vrot.slane %v337, 1
          %v339 = vadd.f32 %v337, %v338
          %v340 = vsel %vm332, %v329, 0.0
          %v341 = vrot.slane %v340, 4
          %v342 = vadd.f32 %v340, %v341
          %v343 = vrot.slane %v342, 2
          %v344 = vadd.f32 %v342, %v343
          %v345 = vrot.slane %v344, 1
          %v346 = vadd.f32 %v344, %v345
          %v347 = vadd.f32 %v330, %v339
          %v348 = vadd.f32 %v331, %v346
          %349 = vst [vmem:[#allocation2] sm:$0x1] %v347
          %350 = vst [vmem:[#allocation2 + $0x1] sm:$0x1] %v348
          %s351 = scalar_lea.vmem [#allocation2], 2
          %v352 = vld [vmem:[%s351] sm:$0x1]
          %v353 = vld [vmem:[%s351 + $0x1] sm:$0x1]
          %v354 = vmul.f32 %v265, %v328
          %v355 = vmul.f32 %v266, %v329
          %v356 = vsel %vm332, %v354, 0.0
          %v357 = vrot.slane %v356, 4
          %v358 = vadd.f32 %v356, %v357
          %v359 = vrot.slane %v358, 2
          %v360 = vadd.f32 %v358, %v359
          %v361 = vrot.slane %v360, 1
          %v362 = vadd.f32 %v360, %v361
          %v363 = vsel %vm332, %v355, 0.0
          %v364 = vrot.slane %v363, 4
          %v365 = vadd.f32 %v363, %v364
          %v366 = vrot.slane %v365, 2
          %v367 = vadd.f32 %v365, %v366
          %v368 = vrot.slane %v367, 1
          %v369 = vadd.f32 %v367, %v368
          %v370 = vadd.f32 %v352, %v362
          %v371 = vadd.f32 %v353, %v369
          %372 = vst [vmem:[%s351] sm:$0x1] %v370
          %373 = vst [vmem:[%s351 + $0x1] sm:$0x1] %v371
          %s374 = scalar_lea.vmem [#allocation2], 4
          %v375 = vld [vmem:[%s374] sm:$0x1]
          %v376 = vld [vmem:[%s374 + $0x1] sm:$0x1]
          %v377 = vsel %vm332, %v265, 0.0
          %v378 = vrot.slane %v377, 4
          %v379 = vadd.f32 %v377, %v378
          %v380 = vrot.slane %v379, 2
          %v381 = vadd.f32 %v379, %v380
          %v382 = vrot.slane %v381, 1
          %v383 = vadd.f32 %v381, %v382
          %v384 = vsel %vm332, %v266, 0.0
          %v385 = vrot.slane %v384, 4
          %v386 = vadd.f32 %v384, %v385
          %v387 = vrot.slane %v386, 2
          %v388 = vadd.f32 %v386, %v387
          %v389 = vrot.slane %v388, 1
          %v390 = vadd.f32 %v388, %v389
          %v391 = vadd.f32 %v375, %v383
          %v392 = vadd.f32 %v376, %v390
          %393 = vst [vmem:[%s374] sm:$0x1] %v391
          %394 = vst [vmem:[%s374 + $0x1] sm:$0x1] %v392
          %s395 = scalar_lea.vmem [#allocation2], 6
          %v396 = vld [vmem:[%s395] sm:$0x1]
          %v397 = vld [vmem:[%s395 + $0x1] sm:$0x1]
          %v398 = vsel %vm332, %v261, 0.0
          %v399 = vrot.slane %v398, 4
          %v400 = vadd.f32 %v398, %v399
          %v401 = vrot.slane %v400, 2
          %v402 = vadd.f32 %v400, %v401
          %v403 = vrot.slane %v402, 1
          %v404 = vadd.f32 %v402, %v403
          %v405 = vsel %vm332, %v262, 0.0
          %v406 = vrot.slane %v405, 4
          %v407 = vadd.f32 %v405, %v406
          %v408 = vrot.slane %v407, 2
          %v409 = vadd.f32 %v407, %v408
          %v410 = vrot.slane %v409, 1
          %v411 = vadd.f32 %v409, %v410
          %v412 = vadd.f32 %v396, %v404
          %v413 = vadd.f32 %v397, %v411
          %414 = vst [vmem:[%s395] sm:$0x1] %v412
          %415 = vst [vmem:[%s395 + $0x1] sm:$0x1] %v413
          %s416 = scalar_lea.vmem [#allocation2], 8
          %v417 = vld [vmem:[%s416] sm:$0x1]
          %v418 = vld [vmem:[%s416 + $0x1] sm:$0x1]
          %v419 = vmul.f32 %v261, %v261
          %v420 = vmul.f32 %v262, %v262
          %v421 = vsel %vm332, %v419, 0.0
          %v422 = vrot.slane %v421, 4
          %v423 = vadd.f32 %v421, %v422
          %v424 = vrot.slane %v423, 2
          %v425 = vadd.f32 %v423, %v424
          %v426 = vrot.slane %v425, 1
          %v427 = vadd.f32 %v425, %v426
          %v428 = vsel %vm332, %v420, 0.0
          %v429 = vrot.slane %v428, 4
          %v430 = vadd.f32 %v428, %v429
          %v431 = vrot.slane %v430, 2
          %v432 = vadd.f32 %v430, %v431
          %v433 = vrot.slane %v432, 1
          %v434 = vadd.f32 %v432, %v433
          %v435 = vadd.f32 %v417, %v427
          %v436 = vadd.f32 %v418, %v434
          %437 = vst [vmem:[%s416] sm:$0x1] %v435
          %438 = vst [vmem:[%s416 + $0x1] sm:$0x1] %v436
        $region108: #{loss_ce_iou.1} parent=91 // pred_fallthru
          _
        // Predicated region
        $region109: #{loss_ce_iou.1} parent=91 // pred_check
          _
        $region110: #{loss_ce_iou.1} parent=91 // pred_check_branch
          %440 = sbr.rel (%p269) target = $region112
        $region111: #{loss_ce_iou.1} parent=91 // pred_region
          %s441 = scalar_lea.vmem [#allocation2], 6
          %v442 = vld [vmem:[%s441] sm:$0x1]
          %v443 = vld [vmem:[%s441 + $0x1] sm:$0x1]
          %vm444 = vcmask 1040384
          %v445 = vsel %vm444, %v442, 0.0
          %446 = vadd.xlane.f32.xlu0 %v445
          %v447 = vpop.xlane.xlu0 %446
          %v448 = vsel %vm444, %v443, 0.0
          %449 = vadd.xlane.f32.xlu0 %v448
          %v450 = vpop.xlane.xlu0 %449
          %v451 = vsel %vm444, %v447, 0.0
          %v452 = vsel %vm444, %v450, 0.0
          %v453 = vadd.f32 %v451, %v452
          %v454 = vmul.f32 %v453, 0.001953125
          %s455 = scalar_lea.vmem [#allocation2], 8
          %v456 = vld [vmem:[%s455] sm:$0x1]
          %v457 = vld [vmem:[%s455 + $0x1] sm:$0x1]
          %v458 = vsel %vm444, %v456, 0.0
          %459 = vadd.xlane.f32.xlu0 %v458
          %v460 = vpop.xlane.xlu0 %459
          %v461 = vsel %vm444, %v457, 0.0
          %462 = vadd.xlane.f32.xlu0 %v461
          %v463 = vpop.xlane.xlu0 %462
          %v464 = vsel %vm444, %v460, 0.0
          %v465 = vsel %vm444, %v463, 0.0
          %v466 = vadd.f32 %v464, %v465
          %v467 = vmul.f32 %v466, 0.001953125
          %v468 = vmul.f32 %v454, %v454
          %v469 = vsub.f32 %v467, %v468
          %v470 = vmax.f32 %v469, 0.0
          %v471 = vadd.f32 %v470, 1e-05
          %v472 = vrsqrt.pop %v471
          %v473 = vmul.f32 %v472, 0.5
          %s474 = scalar_lea.vmem [#allocation2], 14
          %475 = vst [vmem:[%s474] sm:$0x1] %v454
          %476 = vst [vmem:[%s474 + $0x1] sm:$0x1] %v454
          %s477 = scalar_lea.vmem [#allocation2], 16
          %478 = vst [vmem:[%s477] sm:$0x1] %v473
          %479 = vst [vmem:[%s477 + $0x1] sm:$0x1] %v473
        $region112: #{loss_ce_iou.1} parent=91 // pred_fallthru
          _
        %p480 = scmp.eq.s32.totalorder %s19, 1
        // Predicated region
        $region113: #{loss_ce_iou.1} parent=91 // pred_check
          %p481 = pneg %p480
        $region114: #{loss_ce_iou.1} parent=91 // pred_check_branch
          %483 = sbr.rel (%p481) target = $region116
        $region115: #{loss_ce_iou.1} parent=91 // pred_region
          %s484 = scalar_lea.vmem [#allocation2], 14
          %v485 = vld [vmem:[%s484] sm:$0x1]
          %v486 = vld [vmem:[%s484 + $0x1] sm:$0x1]
          %s487 = scalar_lea.vmem [#allocation2], 16
          %v488 = vld [vmem:[%s487] sm:$0x1]
          %v489 = vld [vmem:[%s487 + $0x1] sm:$0x1]
          %v492 = vlaneseq
          %v493 = vshrl.u32 %v492, 7
          %v494 = vsub.s32 0, %v493
          %v495 = vrot.slane %v485, %v494
          %v496 = vlaneseq
          %v497 = vshrl.u32 %v496, 7
          %v498 = vsub.s32 0, %v497
          %v499 = vrot.slane %v486, %v498
          %v502 = vsub.f32 %v261, %v495
          %v503 = vsub.f32 %v262, %v499
          %v506 = vlaneseq
          %v507 = vshrl.u32 %v506, 7
          %v508 = vsub.s32 0, %v507
          %v509 = vrot.slane %v488, %v508
          %v510 = vlaneseq
          %v511 = vshrl.u32 %v510, 7
          %v512 = vsub.s32 0, %v511
          %v513 = vrot.slane %v489, %v512
          %v516 = vmul.f32 %v502, %v509
          %v517 = vmul.f32 %v503, %v513
          %v518 = vadd.f32 %v516, 0.0
          %v519 = vadd.f32 %v517, 0.0
          %v520 = vtanh.pop %v518
          %v521 = vtanh.pop %v519
          %s522 = scalar_lea.vmem [#allocation2], 10
          %v523 = vld [vmem:[%s522] sm:$0x1]
          %v524 = vld [vmem:[%s522 + $0x1] sm:$0x1]
          %vm525 = vcmask 1041408
          %v526 = vsel %vm525, %v520, 0.0
          %v527 = vrot.slane %v526, 4
          %v528 = vadd.f32 %v526, %v527
          %v529 = vrot.slane %v528, 2
          %v530 = vadd.f32 %v528, %v529
          %v531 = vrot.slane %v530, 1
          %v532 = vadd.f32 %v530, %v531
          %v533 = vsel %vm525, %v521, 0.0
          %v534 = vrot.slane %v533, 4
          %v535 = vadd.f32 %v533, %v534
          %v536 = vrot.slane %v535, 2
          %v537 = vadd.f32 %v535, %v536
          %v538 = vrot.slane %v537, 1
          %v539 = vadd.f32 %v537, %v538
          %v540 = vadd.f32 %v523, %v532
          %v541 = vadd.f32 %v524, %v539
          %542 = vst [vmem:[%s522] sm:$0x1] %v540
          %543 = vst [vmem:[%s522 + $0x1] sm:$0x1] %v541
          %s544 = scalar_lea.vmem [#allocation2], 12
          %v545 = vld [vmem:[%s544] sm:$0x1]
          %v546 = vld [vmem:[%s544 + $0x1] sm:$0x1]
          %v547 = vmul.f32 %v520, %v265
          %v548 = vmul.f32 %v521, %v266
          %v549 = vsel %vm525, %v547, 0.0
          %v550 = vrot.slane %v549, 4
          %v551 = vadd.f32 %v549, %v550
          %v552 = vrot.slane %v551, 2
          %v553 = vadd.f32 %v551, %v552
          %v554 = vrot.slane %v553, 1
          %v555 = vadd.f32 %v553, %v554
          %v556 = vsel %vm525, %v548, 0.0
          %v557 = vrot.slane %v556, 4
          %v558 = vadd.f32 %v556, %v557
          %v559 = vrot.slane %v558, 2
          %v560 = vadd.f32 %v558, %v559
          %v561 = vrot.slane %v560, 1
          %v562 = vadd.f32 %v560, %v561
          %v563 = vadd.f32 %v545, %v555
          %v564 = vadd.f32 %v546, %v562
          %565 = vst [vmem:[%s544] sm:$0x1] %v563
          %566 = vst [vmem:[%s544 + $0x1] sm:$0x1] %v564
        $region116: #{loss_ce_iou.1} parent=91 // pred_fallthru
          _
        %p567 = pnand %p480, %p268
        %p568 = pneg %p567
        // Predicated region
        $region117: #{loss_ce_iou.1} parent=91 // pred_check
          _
        $region118: #{loss_ce_iou.1} parent=91 // pred_check_branch
          %570 = sbr.rel (%p567) target = $region120
        $region119: #{loss_ce_iou.1} parent=91 // pred_region
          %v571 = vld [vmem:[#allocation2] sm:$0x1]
          %v572 = vld [vmem:[#allocation2 + $0x1] sm:$0x1]
          %vm573 = vcmask 1040384
          %v574 = vsel %vm573, %v571, 0.0
          %575 = vadd.xlane.f32.xlu0 %v574
          %v576 = vpop.xlane.xlu0 %575
          %v577 = vsel %vm573, %v572, 0.0
          %578 = vadd.xlane.f32.xlu0 %v577
          %v579 = vpop.xlane.xlu0 %578
          %v580 = vsel %vm573, %v576, 0.0
          %v581 = vsel %vm573, %v579, 0.0
          %v582 = vadd.f32 %v580, %v581
          %s583 = scalar_lea.vmem [#allocation2], 2
          %v584 = vld [vmem:[%s583] sm:$0x1]
          %v585 = vld [vmem:[%s583 + $0x1] sm:$0x1]
          %v586 = vsel %vm573, %v584, 0.0
          %587 = vadd.xlane.f32.xlu0 %v586
          %v588 = vpop.xlane.xlu0 %587
          %v589 = vsel %vm573, %v585, 0.0
          %590 = vadd.xlane.f32.xlu0 %v589
          %v591 = vpop.xlane.xlu0 %590
          %v592 = vsel %vm573, %v588, 0.0
          %v593 = vsel %vm573, %v591, 0.0
          %v594 = vadd.f32 %v592, %v593
          %s595 = scalar_lea.vmem [#allocation2], 4
          %v596 = vld [vmem:[%s595] sm:$0x1]
          %v597 = vld [vmem:[%s595 + $0x1] sm:$0x1]
          %v598 = vsel %vm573, %v596, 0.0
          %599 = vadd.xlane.f32.xlu0 %v598
          %v600 = vpop.xlane.xlu0 %599
          %v601 = vsel %vm573, %v597, 0.0
          %602 = vadd.xlane.f32.xlu0 %v601
          %v603 = vpop.xlane.xlu0 %602
          %v604 = vsel %vm573, %v600, 0.0
          %v605 = vsel %vm573, %v603, 0.0
          %v606 = vadd.f32 %v604, %v605
          %s607 = scalar_lea.vmem [#allocation2], 10
          %v608 = vld [vmem:[%s607] sm:$0x1]
          %v609 = vld [vmem:[%s607 + $0x1] sm:$0x1]
          %v610 = vsel %vm573, %v608, 0.0
          %611 = vadd.xlane.f32.xlu0 %v610
          %v612 = vpop.xlane.xlu0 %611
          %v613 = vsel %vm573, %v609, 0.0
          %614 = vadd.xlane.f32.xlu0 %v613
          %v615 = vpop.xlane.xlu0 %614
          %v616 = vsel %vm573, %v612, 0.0
          %v617 = vsel %vm573, %v615, 0.0
          %v618 = vadd.f32 %v616, %v617
          %s619 = scalar_lea.vmem [#allocation2], 12
          %v620 = vld [vmem:[%s619] sm:$0x1]
          %v621 = vld [vmem:[%s619 + $0x1] sm:$0x1]
          %v622 = vsel %vm573, %v620, 0.0
          %623 = vadd.xlane.f32.xlu0 %v622
          %v624 = vpop.xlane.xlu0 %623
          %v625 = vsel %vm573, %v621, 0.0
          %626 = vadd.xlane.f32.xlu0 %v625
          %v627 = vpop.xlane.xlu0 %626
          %v628 = vsel %vm573, %v624, 0.0
          %v629 = vsel %vm573, %v627, 0.0
          %v630 = vadd.f32 %v628, %v629
          %v631 = vmul.f32 %v606, 35.0
          %v632 = vadd.f32 %v631, 512.0
          %v633 = vmul.f32 %v594, 35.0
          %v634 = vadd.f32 %v582, %v633
          %v635 = vrcp.pop %v632
          %v636 = vmul.f32 %v634, %v635
          %v637 = vmul.f32 %v618, 0.5
          %v638 = vadd.f32 %v637, 256.0
          %v639 = vmul.f32 %v630, 0.5
          %v640 = vmul.f32 %v606, 0.5
          %v641 = vadd.f32 %v639, %v640
          %v642 = vadd.f32 %v638, %v606
          %v643 = vsub.f32 %v642, %v641
          %v644 = vrcp.pop %v643
          %v645 = vmul.f32 %v641, %v644
          %v646 = vsub.f32 1.0, %v645
          %v647 = vmul.f32 %v646, 0.67
          %v648 = vmul.f32 %v636, 0.33
          %v649 = vadd.f32 %v647, %v648
          %vm650 = vcmask 0
          %651 = vst.msk [vmem:[#allocation5] sm:$0x1] %vm650, %v649
        $region120: #{loss_ce_iou.1} parent=91 // pred_fallthru
          _
        // Predicated region
        $region121: #{loss_ce_iou.1} parent=91 // pred_check
          %p652 = pneg %p118
        $region122: #{loss_ce_iou.1} parent=91 // pred_check_branch
          %654 = sbr.rel (%p652) target = $region124
        $region123: #{loss_ce_iou.1} parent=91 // pred_region
          %s656 = ssub.s32 16, 16
          %657 = vsyncadd [#allocation6], %s656
          %s659 = sshll.u32 [#allocation5], 4
          %s660 = int_to_ptr.vmem [resolvable:$true] %s659
          %662 = dma.vmem_to_hbm [thread:$0]  %s660, 16, %s3, [#allocation6]
        $region124: #{loss_ce_iou.1} parent=91 // pred_fallthru
          _
        // Predicated region
        $region125: #{loss_ce_iou.1} parent=91 // pred_check
          %p663 = pneg %p118
        $region126: #{loss_ce_iou.1} parent=91 // pred_check_branch
          %665 = sbr.rel (%p663) target = $region128
        $region127: #{loss_ce_iou.1} parent=91 // pred_region
          %666 = dma.done [#allocation6], 16
        $region128: #{loss_ce_iou.1} parent=91 // pred_fallthru
          _
      $region92: #{loss_ce_iou.1} parent=5 // pred_fallthru
        _
      %p667 = scmp.le.s32.totalorder 2, %s10
      // Predicated region
      $region129: #{loss_ce_iou.1} parent=5 // pred_check
        %p668 = pneg %p667
      $region130: #{loss_ce_iou.1} parent=5 // pred_check_branch
        %670 = sbr.rel (%p668) target = $region132
      $region131: #{loss_ce_iou.1} parent=5 // pred_region
        %s671 = ssub.s32 %s10, 2
      $region132: #{loss_ce_iou.1} parent=5 // pred_fallthru
        _
    $region6: #{loss_ce_iou.1} parent=1 // loop_footer
      %s14 = sadd.s32 1, %s10
    $region7: #{loss_ce_iou.1} parent=1 // loop_footer_branch
      %9 = sbr.rel target = $region3
    $region8: #{loss_ce_iou.1} parent=1 // loop_exit
      _
    %672 = vsyncpa [#allocation6], 1
    %s673 = scalar_lea.sflag [#allocation6], 1
    %674 = vsyncpa %s673, 1

</llo_original>
